<compile_context>
chip_gen: v7x
topology: tpu7x:2x2x1
jax: 0.10.0
libtpu: 0.0.40
codegen_flags: <defaults>
</compile_context>

<pallas_src>
import functools

import jax
import jax.numpy as jnp
import numpy as np
from jax.experimental import pallas as pl
from jax.experimental.pallas import tpu as pltpu

_LANE = 128


def _drop_path_kernel(x_ref, scale_ref, o_ref):
    # x_ref / o_ref: (tb, tf) tile of features; scale_ref: (tb, 1) per-sample
    # scale (0 or 1/keep_prob) already in x's dtype.  Pure VPU broadcast-mul.
    o_ref[...] = x_ref[...] * scale_ref[...]


def _choose_tiles(B, F, itemsize):
    """Pick (tb, tf) block dims for a (B, F) tensor.

    Legality: tb must be all of B or a multiple of the dtype sublane tile;
    tf must be all of F or a multiple of 128 (lane-dense stores).
    """
    sub = max(8, 32 // itemsize)       # sublane tile: 8 (f32) / 16 (bf16) / 32 (i8)
    target = 2 << 20                   # ~2 MiB per block (~85% HBM roofline)
    min_block = 256 << 10              # never shrink blocks below this
    min_steps = 8                      # give v7x's 2 TensorCores several steps

    tb = B if B <= sub else sub        # minimal legal batch tile
    if F <= _LANE or F * tb * itemsize <= target:
        # Whole rows fit in a block: grow the batch tile toward the target.
        tf = F
        want = target // max(1, F * itemsize)
        if want >= B:
            tb = B
        elif want > tb:
            tb = min(B, (want // sub) * sub)
    else:
        # Tile the feature axis in lane-dense multiples of 128.
        tf = min((F // _LANE) * _LANE,
                 max(_LANE, (target // (tb * itemsize) // _LANE) * _LANE))

    def steps(tb_, tf_):
        return pl.cdiv(B, tb_) * pl.cdiv(F, tf_)

    def block_bytes(tb_, tf_):
        return tb_ * tf_ * itemsize

    # Shrink blocks (batch axis first, keeping rows lane-dense) until the grid
    # has enough steps for both TensorCores — but keep blocks >= min_block so
    # tiny tensors don't become per-step-overhead dominated.
    while steps(tb, tf) < min_steps:
        new_tb = max(sub, ((tb // 2) // sub) * sub) if tb > sub else tb
        if new_tb < tb and block_bytes(new_tb, tf) >= min_block:
            tb = new_tb
            continue
        new_tf = max(_LANE, ((tf // 2) // _LANE) * _LANE) if tf > _LANE else tf
        if new_tf < tf and block_bytes(tb, new_tf) >= min_block:
            tf = new_tf
            continue
        break
    return tb, tf


def _drop_path_2d(x2, scale, tb, tf):
    B, F = x2.shape
    grid = (pl.cdiv(B, tb), pl.cdiv(F, tf))
    return pl.pallas_call(
        _drop_path_kernel,
        out_shape=jax.ShapeDtypeStruct((B, F), x2.dtype),
        grid=grid,
        in_specs=[
            pl.BlockSpec((tb, tf), lambda i, j: (i, j)),   # feature tile
            pl.BlockSpec((tb, 1), lambda i, j: (i, 0)),    # per-sample scale
        ],
        out_specs=pl.BlockSpec((tb, tf), lambda i, j: (i, j)),
        compiler_params=pltpu.CompilerParams(
            dimension_semantics=("parallel", "parallel"),
        ),
    )(x2, scale)


@functools.partial(jax.jit,
                   static_argnames=("drop_prob", "training", "scale_by_keep"))
def drop_path_pallas(x, key, drop_prob: float = 0.0, training: bool = False,
                     scale_by_keep: bool = True):
    """Pallas DropPath.  x: any rank >= 1, batch on axis 0.  `key` is a JAX
    PRNG key; callers should thread a fresh key per invocation."""
    if drop_prob == 0.0 or not training:
        return x

    keep_prob = 1.0 - drop_prob
    B = x.shape[0]
    F = int(np.prod(x.shape[1:])) if x.ndim > 1 else 1

    # Per-sample keep mask (B values) in plain JAX; folded with 1/keep_prob
    # and cast to x's dtype (matches PyTorch's in-dtype div_).
    keep = jax.random.bernoulli(key, p=keep_prob, shape=(B, 1))
    scale = keep.astype(jnp.float32)
    if scale_by_keep and keep_prob > 0.0:
        scale = scale / keep_prob
    scale = scale.astype(x.dtype)

    tb, tf = _choose_tiles(B, F, jnp.dtype(x.dtype).itemsize)
    out2 = _drop_path_2d(x.reshape(B, F), scale, tb, tf)
    return out2.reshape(x.shape)


def _check_drop_path(x, y, drop_prob, scale_by_keep, rtol=1e-5, atol=1e-5):
    keep_prob = 1.0 - drop_prob
    scale = (1.0 / keep_prob) if (scale_by_keep and keep_prob > 0.0) else 1.0
    x_np = np.asarray(jnp.asarray(x, jnp.float32))
    y_np = np.asarray(jnp.asarray(y, jnp.float32))
    for b in range(x_np.shape[0]):
        kept = np.allclose(y_np[b], x_np[b] * scale, rtol=rtol, atol=atol)
        dropped = np.allclose(y_np[b], 0.0)
        assert kept or dropped, f"sample {b}: not a valid DropPath output"


if __name__ == "__main__":
    root = jax.random.PRNGKey(0)
    k_data, k_drop = jax.random.split(root)

    # Small NCHW input: batch=2, channels=4, spatial 16x16 (F = 1024).
    x = jax.random.normal(k_data, (2, 4, 16, 16), dtype=jnp.float32)
    drop_prob, scale_by_keep = 0.25, True

    y = drop_path_pallas(x, k_drop, drop_prob=drop_prob, training=True,
                         scale_by_keep=scale_by_keep)
    y = jax.block_until_ready(y)
    _check_drop_path(x, y, drop_prob, scale_by_keep)

    # Eval mode / drop_prob == 0 are the identity.
    y_eval = drop_path_pallas(x, k_drop, drop_prob=drop_prob, training=False)
    assert np.allclose(np.asarray(y_eval), np.asarray(x))
    y_zero = drop_path_pallas(x, k_drop, drop_prob=0.0, training=True)
    assert np.allclose(np.asarray(y_zero), np.asarray(x))

    # Larger batch (>8) with F % 128 != 0: ragged feature dim handled by
    # edge-block masking — no padding / slicing passes.
    x_big = jax.random.normal(jax.random.PRNGKey(1), (16, 3, 8, 8),
                              dtype=jnp.float32)
    y_big = drop_path_pallas(x_big, jax.random.PRNGKey(7), drop_prob=0.5,
                             training=True, scale_by_keep=True)
    _check_drop_path(x_big, jax.block_until_ready(y_big), 0.5, True)

    # bf16 path (sublane tile of 16) with a non-multiple-of-128 feature size.
    x_bf = jax.random.normal(jax.random.PRNGKey(2), (4, 8, 25, 25),
                             dtype=jnp.bfloat16)
    y_bf = drop_path_pallas(x_bf, jax.random.PRNGKey(3), drop_prob=drop_prob,
                            training=True, scale_by_keep=True)
    _check_drop_path(x_bf, jax.block_until_ready(y_bf), drop_prob, True,
                     rtol=5e-2, atol=1e-2)

    print("KERNEL_OK")
</pallas_src>

<mosaic_0001>
module attributes {stable_mosaic.version = 11 : i64} {
  func.func @_drop_path_kernel(%arg0: i32, %arg1: i32, %arg2: memref<2x1024xf32, #tpu.memory_space<vmem>>, %arg3: memref<2x1xf32, #tpu.memory_space<vmem>>, %arg4: memref<2x1024xf32, #tpu.memory_space<vmem>>) attributes {dimension_semantics = [#tpu.dimension_semantics<parallel>, #tpu.dimension_semantics<parallel>], iteration_bounds = array<i64: 1, 1>, scalar_prefetch = 0 : i64, scratch_operands = 0 : i64, tpu.core_type = #tpu.core_type<tc>, window_params = [{transform_indices = @transform_0, window_bounds = array<i64: 2, 1024>}, {transform_indices = @transform_1, window_bounds = array<i64: 2, 1>}, {transform_indices = @transform_2, window_bounds = array<i64: 2, 1024>}]} {
    %c0 = arith.constant 0 : index
    %c0_0 = arith.constant 0 : index
    %0 = vector.load %arg2[%c0, %c0_0] : memref<2x1024xf32, #tpu.memory_space<vmem>>, vector<2x1024xf32>
    %c0_1 = arith.constant 0 : index
    %c0_2 = arith.constant 0 : index
    %1 = vector.load %arg3[%c0_1, %c0_2] : memref<2x1xf32, #tpu.memory_space<vmem>>, vector<2x1xf32>
    %2 = vector.broadcast %1 : vector<2x1xf32> to vector<2x1024xf32>
    %3 = arith.mulf %0, %2 : vector<2x1024xf32>
    %c0_3 = arith.constant 0 : index
    %c0_4 = arith.constant 0 : index
    %4 = vector.load %arg4[%c0_3, %c0_4] : memref<2x1024xf32, #tpu.memory_space<vmem>>, vector<2x1024xf32>
    tpu.vector_store %arg4[%c0_3, %c0_4], %3 {strides = array<i32>} : memref<2x1024xf32, #tpu.memory_space<vmem>>, vector<2x1024xf32>,
    return
  }
  func.func @transform_0(%arg0: i32, %arg1: i32) -> (i32, i32) {
    %c0_i32 = arith.constant 0 : i32
    return %arg0, %arg1 : i32, i32
  }
  func.func @transform_1(%arg0: i32, %arg1: i32) -> (i32, i32) {
    %c0_i32 = arith.constant 0 : i32
    %c0_i32_0 = arith.constant 0 : i32
    return %arg0, %c0_i32 : i32, i32
  }
  func.func @transform_2(%arg0: i32, %arg1: i32) -> (i32, i32) {
    %c0_i32 = arith.constant 0 : i32
    return %arg0, %arg1 : i32, i32
  }
}

</mosaic_0001>

<llo_original>
// kernel: drop_path_pallas.1
$region0: #{drop_path_pallas.1}
  #allocation0 [shape = 'u32[]', space=smem, size = 0x4, offset = 0x4, fixed_abs, tag = 'smem constant byte address 0x4 - core index']
  #allocation1 [shape = 'u32[144,128]{1,0:T(1,128)}', space=vmem, size = 0x12000, scoped, tag = 'internal scratch']
  %s0 = inlined_call_operand.vmem [shape: f32[2,1024], index: 0, kind: input, shape index: {}]
  %s1 = inlined_call_operand.vmem [shape: f32[2,1], index: 1, kind: input, shape index: {}]
  %s2 = inlined_call_operand.vmem [shape: f32[2,1024], index: 2, kind: output, shape index: {}]
  %s3 = sld [smem:[#allocation0]]
  $region18: #{drop_path_pallas.1} parent=0
    _
  %s5 = ssub.s32 1, %s3
  %s6 = scalar_select 0, %s5, %s3
  // Predicated region
  $region2: #{drop_path_pallas.1} parent=0 // pred_check
    _
  $region3: #{drop_path_pallas.1} parent=0 // pred_check_branch
    %8 = sbr.rel (0) target = $region5
  $region4: #{drop_path_pallas.1} parent=0 // pred_region
    _
  $region5: #{drop_path_pallas.1} parent=0 // pred_fallthru
    _
  // Predicated region
  $region6: #{drop_path_pallas.1} parent=0 // pred_check
    _
  $region7: #{drop_path_pallas.1} parent=0 // pred_check_branch
    %10 = sbr.rel (0) target = $region9
  $region8: #{drop_path_pallas.1} parent=0 // pred_region
    _
  $region9: #{drop_path_pallas.1} parent=0 // pred_fallthru
    _
  %v11 = vld [vmem:[%s0] sm:$0xff]
  %v12 = vld [vmem:[%s0 + $0x8] sm:$0xff]
  %v13 = vld [vmem:[%s1] sm:$0x3]
  %15 = vset.pattern.permute.xlu0 0
  %16 = vperm.xlu0 %15, %v13
  %v17 = vpop.permute.xlu0 %16
  %v19 = vunpack.c.l.s4 269488144
  %v20 = vunpack.c.0.s8 %v19
  %v21 = vlaneseq
  %v22 = vshrl.u32 %v21, 7
  %v23 = vsub.s32 %v20, %v22
  %v24 = vrot.slane %v17, %v23
  %v26 = vmul.f32 %v11, %v24
  %v27 = vmul.f32 %v12, %v24
  %28 = vst [vmem:[%s2] sm:$0xff] %v26
  %29 = vst [vmem:[%s2 + $0x8] sm:$0xff] %v27
  // Predicated region
  $region10: #{drop_path_pallas.1} parent=0 // pred_check
    _
  $region11: #{drop_path_pallas.1} parent=0 // pred_check_branch
    %31 = sbr.rel (0) target = $region13
  $region12: #{drop_path_pallas.1} parent=0 // pred_region
    _
  $region13: #{drop_path_pallas.1} parent=0 // pred_fallthru
    _
  // Predicated region
  $region14: #{drop_path_pallas.1} parent=0 // pred_check
    _
  $region15: #{drop_path_pallas.1} parent=0 // pred_check_branch
    %33 = sbr.rel (0) target = $region17
  $region16: #{drop_path_pallas.1} parent=0 // pred_region
    _
  $region17: #{drop_path_pallas.1} parent=0 // pred_fallthru
    _

</llo_original>
